<compile_context>
chip_gen: v5e
topology: v5e:2x2
jax: 0.10.0
libtpu: 0.0.40
codegen_flags: <defaults>
</compile_context>

<pallas_src>
import functools

import jax
import jax.numpy as jnp
from jax.experimental import pallas as pl
from jax.experimental.pallas import tpu as pltpu


# --------------------------------------------------------------------------
# Packed path: H*W % 128 == 0  →  logits [B, C, G, 128], pixels fill vregs.
# --------------------------------------------------------------------------
def _ce_kernel_packed(logits_ref, targets_ref, out_ref, acc_ref, *,
                      n_groups, j_per_split, need_mask):
    """One (batch b, pixel-split p, group-tile j) grid step.

    logits_ref : (1, C, G_tile, 128) raw logits
    targets_ref: (1, 1, G_tile, 128) int8/int32 class indices
    out_ref    : (1, 1, 1, 1) f32 per-(batch, split) loss sum
    acc_ref    : (acc_rows, 128) f32 lane-wide accumulator (VMEM scratch)
    """
    p = pl.program_id(1)
    j = pl.program_id(2)

    @pl.when(j == 0)
    def _():
        acc_ref[...] = jnp.zeros_like(acc_ref)

    logits = logits_ref[0].astype(jnp.float32)        # (C, G_tile, 128)
    tgt = targets_ref[0, 0].astype(jnp.int32)         # (G_tile, 128)
    c, g_tile, _ = logits.shape

    if need_mask:
        # Garbage groups: past the array edge (partial last tile) or a
        # duplicated (clamped) tile from the megacore pixel split.
        tile_idx = p * j_per_split + j
        g_iota = jax.lax.broadcasted_iota(jnp.int32, (g_tile, 128), 0)
        valid = (tile_idx * g_tile + g_iota) < n_groups            # (G_tile,128)
        logits = jnp.where(valid[None, :, :], logits, 0.0)         # keep finite

    # Numerically stable log-sum-exp over the class axis (leading dim →
    # elementwise VPU over full vregs; exp on full vregs).
    # NOTE: keep exp in f32 — a bf16 exp would roughly double EUP throughput
    # on v7x but does not meet the 1e-5 accuracy bar used here.
    m = jnp.max(logits, axis=0)                                    # (G_tile,128)
    lse = m + jnp.log(jnp.sum(jnp.exp(logits - m[None, :, :]), axis=0))

    # Gather target logit via one-hot compare (no dynamic gather on TPU).
    cls = jax.lax.broadcasted_iota(jnp.int32, (c, g_tile, 128), 0)
    tgt_logit = jnp.sum(jnp.where(cls == tgt[None, :, :], logits, 0.0), axis=0)

    loss = lse - tgt_logit                                         # (G_tile,128)
    if need_mask:
        loss = jnp.where(valid, loss, 0.0)

    # Lane-wide accumulation: pure VPU adds, no per-step XLU reduce.
    if g_tile % 8 == 0:
        acc_ref[...] += loss.reshape(g_tile // 8, 8, 128).sum(axis=0)
    else:  # tiny spatial extent: G_tile == G < 8
        acc_ref[...] += loss

    @pl.when(j == pl.num_programs(2) - 1)
    def _():
        out_ref[...] = jnp.sum(acc_ref[...]).reshape(1, 1, 1, 1)


def _pix_index_map(j_per_split, n_tiles, clamp):
    """Block index along the group axis for the (batch, split, tile) grid."""
    if clamp:
        # Odd tile count split across 2 "parallel" slices: clamp the duplicate
        # (its contribution is fully masked inside the kernel).
        return lambda bi, p, j: (bi, 0,
                                 jnp.minimum(p * j_per_split + j, n_tiles - 1), 0)
    return lambda bi, p, j: (bi, 0, p * j_per_split + j, 0)


def _ce_sum_packed(logits_nchw, targets_bhw, block_bytes, tgt_dtype):
    b, c, h, w = logits_nchw.shape
    hw = h * w
    g = hw // 128

    # Free metadata reshapes — native NCHW, no transpose, no pad.
    x = logits_nchw.reshape(b, c, g, 128)
    t = targets_bhw.reshape(b, 1, g, 128).astype(tgt_dtype)

    # Group-tile sizing: keep the f32 logits block near `block_bytes`; tiles
    # are either the full group axis or a multiple of 32 (legal for int8 too).
    per_group_bytes = c * 128 * x.dtype.itemsize
    budget_groups = max(32, (block_bytes // per_group_bytes) // 32 * 32)
    g_tile = int(g) if g <= budget_groups else int(budget_groups)
    n_tiles = pl.cdiv(g, g_tile)

    # Megacore coverage for small / odd batch: split tiles across a second
    # "parallel" axis so both v7x TensorCores get work even at B == 1.
    p_split = 2 if n_tiles >= 2 else 1
    j_per_split = pl.cdiv(n_tiles, p_split)
    clamp = (n_tiles % p_split) != 0
    need_mask = (g % g_tile != 0) or clamp
    acc_rows = 8 if g_tile % 8 == 0 else g_tile

    idx = _pix_index_map(j_per_split, n_tiles, clamp)
    grid = (b, p_split, j_per_split)

    n_pix = b * hw
    cost = pl.CostEstimate(
        flops=int(6 * n_pix * c),
        transcendentals=int(n_pix * (c + 1)),
        bytes_accessed=int(n_pix * c * x.dtype.itemsize
                           + n_pix * t.dtype.itemsize
                           + b * p_split * 4),
    )

    partials = pl.pallas_call(
        functools.partial(_ce_kernel_packed, n_groups=int(g),
                          j_per_split=int(j_per_split), need_mask=need_mask),
        out_shape=jax.ShapeDtypeStruct((b, p_split, 1, 1), jnp.float32),
        grid_spec=pltpu.PrefetchScalarGridSpec(
            num_scalar_prefetch=0,
            grid=grid,
            in_specs=[
                pl.BlockSpec((1, c, g_tile, 128), idx),
                pl.BlockSpec((1, 1, g_tile, 128), idx),
            ],
            out_specs=pl.BlockSpec((1, 1, 1, 1), lambda bi, p, j: (bi, p, 0, 0)),
            scratch_shapes=[pltpu.VMEM((acc_rows, 128), jnp.float32)],
        ),
        compiler_params=pltpu.CompilerParams(
            dimension_semantics=("parallel", "parallel", "arbitrary"),
            vmem_limit_bytes=max(32 * 1024 * 1024, 12 * block_bytes),
        ),
        cost_estimate=cost,
    )(x, t)
    return jnp.sum(partials)


# --------------------------------------------------------------------------
# Flat fallback path: H*W % 128 != 0  →  logits [B, C, H*W], masked last tile.
# --------------------------------------------------------------------------
def _ce_kernel_flat(logits_ref, targets_ref, out_ref, *, hw, need_mask):
    j = pl.program_id(1)

    logits = logits_ref[0].astype(jnp.float32)          # (C, T)
    tgt = targets_ref[0].astype(jnp.int32)               # (1, T)
    c, t = logits.shape

    if need_mask:
        col = j * t + jax.lax.broadcasted_iota(jnp.int32, (1, t), 1)
        valid = col < hw
        logits = jnp.where(valid, logits, 0.0)            # keep finite

    m = jnp.max(logits, axis=0, keepdims=True)
    lse = m + jnp.log(jnp.sum(jnp.exp(logits - m), axis=0, keepdims=True))
    cls = jax.lax.broadcasted_iota(jnp.int32, (c, t), 0)
    tgt_logit = jnp.sum(jnp.where(cls == tgt, logits, 0.0), axis=0, keepdims=True)

    loss = lse - tgt_logit
    if need_mask:
        loss = jnp.where(valid, loss, 0.0)
    psum = jnp.sum(loss)

    @pl.when(j == 0)
    def _():
        out_ref[...] = jnp.zeros_like(out_ref)
    out_ref[...] += psum.reshape(1, 1, 1)


def _pick_tile_hw(hw, c, bytes_budget):
    if hw <= 128:
        return int(hw)                         # block == full dim (always legal)
    max_by_budget = max(128, ((bytes_budget // (c * 4)) // 128) * 128)
    full_tiles = (hw // 128) * 128
    return int(min(max_by_budget, full_tiles))


def _ce_sum_flat(logits_nchw, targets_bhw, block_bytes, tgt_dtype):
    b, c, h, w = logits_nchw.shape
    hw = h * w
    x = logits_nchw.reshape(b, c, hw)
    t = targets_bhw.reshape(b, 1, hw).astype(tgt_dtype)

    tile_hw = _pick_tile_hw(hw, c, block_bytes)
    need_mask = (hw % tile_hw) != 0
    grid = (b, pl.cdiv(hw, tile_hw))

    n_pix = b * hw
    cost = pl.CostEstimate(
        flops=int(6 * n_pix * c),
        transcendentals=int(n_pix * (c + 1)),
        bytes_accessed=int(n_pix * c * x.dtype.itemsize
                           + n_pix * t.dtype.itemsize + b * 4),
    )

    partials = pl.pallas_call(
        functools.partial(_ce_kernel_flat, hw=hw, need_mask=need_mask),
        out_shape=jax.ShapeDtypeStruct((b, 1, 1), jnp.float32),
        grid_spec=pltpu.PrefetchScalarGridSpec(
            num_scalar_prefetch=0,
            grid=grid,
            in_specs=[
                pl.BlockSpec((1, c, tile_hw), lambda bi, j: (bi, 0, j)),
                pl.BlockSpec((1, 1, tile_hw), lambda bi, j: (bi, 0, j)),
            ],
            out_specs=pl.BlockSpec((1, 1, 1), lambda bi, j: (bi, 0, 0)),
        ),
        compiler_params=pltpu.CompilerParams(
            dimension_semantics=("parallel", "arbitrary"),
            vmem_limit_bytes=max(32 * 1024 * 1024, 12 * block_bytes),
        ),
        cost_estimate=cost,
    )(x, t)
    return jnp.sum(partials)


# --------------------------------------------------------------------------
# Public wrapper
# --------------------------------------------------------------------------
def cross_entropy_loss(logits_nchw, targets_bhw, *, block_bytes=2 << 20):
    """Mean softmax cross entropy, matching nn.CrossEntropyLoss(reduction='mean').

    logits_nchw: float array [B, C, H, W] (raw logits)
    targets_bhw: int array   [B, H, W]    (class indices in [0, C))
    block_bytes: target size of one logits DMA block (2 MiB is v7x-safe;
                 v5e/v6e may use 4 MiB).
    returns: scalar float32 loss
    """
    b, c, h, w = logits_nchw.shape
    hw = h * w
    n_pix = b * hw

    # int8 labels cut kernel HBM traffic ~15% at C=4 (store labels as
    # int8/uint8 upstream and the cast is free).
    tgt_dtype = jnp.int8 if c <= 127 else jnp.int32

    if hw % 128 == 0:
        loss_sum = _ce_sum_packed(logits_nchw, targets_bhw, block_bytes, tgt_dtype)
    else:
        loss_sum = _ce_sum_flat(logits_nchw, targets_bhw, block_bytes, tgt_dtype)
    return loss_sum / jnp.float32(n_pix)


def _reference_loss(logits_nchw, targets_bhw):
    b, c, h, w = logits_nchw.shape
    x = jnp.transpose(logits_nchw, (0, 2, 3, 1)).reshape(-1, c).astype(jnp.float32)
    t = targets_bhw.reshape(-1)
    lse = jax.scipy.special.logsumexp(x, axis=-1)
    tgt = jnp.take_along_axis(x, t[:, None], axis=-1)[:, 0]
    return jnp.mean(lse - tgt)


if __name__ == "__main__":
    num_classes = 4
    key = jax.random.PRNGKey(0)
    k_logits, k_targets = jax.random.split(key)

    # 1) Packed path, single tile per batch (H*W = 256, multiple of 128).
    B, H, W = 2, 16, 16
    logits = jax.random.normal(k_logits, (B, num_classes, H, W), dtype=jnp.float32)
    targets = jax.random.randint(k_targets, (B, H, W), 0, num_classes, dtype=jnp.int32)
    loss = jax.block_until_ready(cross_entropy_loss(logits, targets))
    ref = jax.block_until_ready(_reference_loss(logits, targets))
    assert jnp.allclose(loss, ref, atol=1e-5, rtol=1e-5), (loss, ref)

    # 2) Packed path, multiple group-tiles + megacore pixel split + masked
    #    partial last tile (small block budget forces multi-tile at test scale).
    B3, H3, W3 = 1, 80, 80                       # H*W = 6400 = 50 groups of 128
    l3 = jax.random.normal(k_logits, (B3, num_classes, H3, W3), dtype=jnp.float32)
    t3 = jax.random.randint(k_targets, (B3, H3, W3), 0, num_classes, dtype=jnp.int32)
    loss3 = jax.block_until_ready(cross_entropy_loss(l3, t3, block_bytes=64 * 1024))
    ref3 = jax.block_until_ready(_reference_loss(l3, t3))
    assert jnp.allclose(loss3, ref3, atol=1e-5, rtol=1e-5), (loss3, ref3)

    # 3) Flat fallback path: H*W = 160 (not a multiple of 128), masked tile.
    H2, W2 = 16, 10
    l2 = jax.random.normal(k_logits, (B, num_classes, H2, W2), dtype=jnp.float32)
    t2 = jax.random.randint(k_targets, (B, H2, W2), 0, num_classes, dtype=jnp.int32)
    loss2 = jax.block_until_ready(cross_entropy_loss(l2, t2))
    ref2 = jax.block_until_ready(_reference_loss(l2, t2))
    assert jnp.allclose(loss2, ref2, atol=1e-5, rtol=1e-5), (loss2, ref2)

    print("KERNEL_OK")
</pallas_src>

<mosaic_0001>
module attributes {stable_mosaic.version = 11 : i64} {
  func.func @_ce_kernel_packed(%arg0: i32, %arg1: i32, %arg2: i32, %arg3: memref<1x4x2x128xf32, #tpu.memory_space<vmem>>, %arg4: memref<1x1x2x128xi8, #tpu.memory_space<vmem>>, %arg5: memref<1x1x1x1xf32, #tpu.memory_space<vmem>>, %arg6: memref<2x128xf32, #tpu.memory_space<vmem>>) attributes {dimension_semantics = [#tpu.dimension_semantics<parallel>, #tpu.dimension_semantics<parallel>, #tpu.dimension_semantics<arbitrary>], iteration_bounds = array<i64: 2, 1, 1>, scalar_prefetch = 0 : i64, scratch_operands = 1 : i64, tpu.core_type = #tpu.core_type<tc>, window_params = [{transform_indices = @transform_0, window_bounds = array<i64: 1, 4, 2, 128>}, {transform_indices = @transform_1, window_bounds = array<i64: 1, 1, 2, 128>}, {transform_indices = @transform_2, window_bounds = array<i64: 1, 1, 1, 1>}]} {
    %c0_i32 = arith.constant 0 : i32
    %0 = arith.cmpi eq, %arg2, %c0_i32 : i32
    %1 = arith.extui %0 : i1 to i32
    %c0_i32_0 = arith.constant 0 : i32
    %2 = arith.cmpi ne, %1, %c0_i32_0 : i32
    scf.if %2 {
      %cst_17 = arith.constant 0.000000e+00 : f32
      %30 = vector.broadcast %cst_17 : f32 to vector<2x128xf32>
      %c0_18 = arith.constant 0 : index
      %c0_19 = arith.constant 0 : index
      %31 = vector.load %arg6[%c0_18, %c0_19] : memref<2x128xf32, #tpu.memory_space<vmem>>, vector<2x128xf32>
      tpu.vector_store %arg6[%c0_18, %c0_19], %30 {strides = array<i32>} : memref<2x128xf32, #tpu.memory_space<vmem>>, vector<2x128xf32>,
    } else {
    }
    %c0 = arith.constant 0 : index
    %c0_1 = arith.constant 0 : index
    %c0_2 = arith.constant 0 : index
    %c0_3 = arith.constant 0 : index
    %3 = vector.load %arg3[%c0, %c0_1, %c0_2, %c0_3] : memref<1x4x2x128xf32, #tpu.memory_space<vmem>>, vector<1x4x2x128xf32>
    %4 = vector.shape_cast %3 : vector<1x4x2x128xf32> to vector<4x2x128xf32>
    %c0_4 = arith.constant 0 : index
    %c0_5 = arith.constant 0 : index
    %c0_6 = arith.constant 0 : index
    %c0_7 = arith.constant 0 : index
    %5 = vector.load %arg4[%c0_4, %c0_5, %c0_6, %c0_7] : memref<1x1x2x128xi8, #tpu.memory_space<vmem>>, vector<1x1x2x128xi8>
    %6 = vector.shape_cast %5 : vector<1x1x2x128xi8> to vector<2x128xi8>
    %7 = arith.extsi %6 : vector<2x128xi8> to vector<2x128xi32>
    %cst = arith.constant dense<0xFF800000> : vector<2x128xf32>
    %8 = vector.multi_reduction <maximumf>, %4, %cst [0] : vector<4x2x128xf32> to vector<2x128xf32>
    %9 = vector.shape_cast %8 : vector<2x128xf32> to vector<1x2x128xf32>
    %10 = vector.broadcast %9 : vector<1x2x128xf32> to vector<4x2x128xf32>
    %11 = arith.subf %4, %10 : vector<4x2x128xf32>
    %12 = math.exp %11 : vector<4x2x128xf32>
    %cst_8 = arith.constant dense<0.000000e+00> : vector<2x128xf32>
    %13 = vector.multi_reduction <add>, %12, %cst_8 [0] : vector<4x2x128xf32> to vector<2x128xf32>
    %14 = math.log %13 : vector<2x128xf32>
    %15 = arith.addf %8, %14 : vector<2x128xf32>
    %16 = tpu.iota {dimensions = array<i32: 0>} : vector<4x2x128xi32>
    %17 = vector.shape_cast %7 : vector<2x128xi32> to vector<1x2x128xi32>
    %18 = vector.broadcast %17 : vector<1x2x128xi32> to vector<4x2x128xi32>
    %19 = arith.cmpi eq, %16, %18 : vector<4x2x128xi32>
    %cst_9 = arith.constant 0.000000e+00 : f32
    %20 = vector.broadcast %cst_9 : f32 to vector<4x2x128xf32>
    %21 = arith.select %19, %4, %20 : vector<4x2x128xi1>, vector<4x2x128xf32>
    %cst_10 = arith.constant dense<0.000000e+00> : vector<2x128xf32>
    %22 = vector.multi_reduction <add>, %21, %cst_10 [0] : vector<4x2x128xf32> to vector<2x128xf32>
    %23 = arith.subf %15, %22 : vector<2x128xf32>
    %c0_11 = arith.constant 0 : index
    %c0_12 = arith.constant 0 : index
    %24 = vector.load %arg6[%c0_11, %c0_12] : memref<2x128xf32, #tpu.memory_space<vmem>>, vector<2x128xf32>
    %25 = arith.addf %24, %23 : vector<2x128xf32>
    %c0_13 = arith.constant 0 : index
    %c0_14 = arith.constant 0 : index
    %26 = vector.load %arg6[%c0_13, %c0_14] : memref<2x128xf32, #tpu.memory_space<vmem>>, vector<2x128xf32>
    tpu.vector_store %arg6[%c0_13, %c0_14], %25 {strides = array<i32>} : memref<2x128xf32, #tpu.memory_space<vmem>>, vector<2x128xf32>,
    %c0_i32_15 = arith.constant 0 : i32
    %27 = arith.cmpi eq, %arg2, %c0_i32_15 : i32
    %28 = arith.extui %27 : i1 to i32
    %c0_i32_16 = arith.constant 0 : i32
    %29 = arith.cmpi ne, %28, %c0_i32_16 : i32
    scf.if %29 {
      %c0_17 = arith.constant 0 : index
      %c0_18 = arith.constant 0 : index
      %30 = vector.load %arg6[%c0_17, %c0_18] : memref<2x128xf32, #tpu.memory_space<vmem>>, vector<2x128xf32>
      %31 = vector.shape_cast %30 : vector<2x128xf32> to vector<1x2x128xf32>
      %cst_19 = arith.constant dense<0.000000e+00> : vector<1xf32>
      %32 = vector.multi_reduction <add>, %31, %cst_19 [1, 2] : vector<1x2x128xf32> to vector<1xf32>
      %33 = vector.shape_cast %32 : vector<1xf32> to vector<1x1x1xf32>
      %34 = vector.extract %33[0, 0, 0] : f32 from vector<1x1x1xf32>
      %35 = vector.broadcast %34 : f32 to vector<1x1x1x1xf32>
      %c0_20 = arith.constant 0 : index
      %c0_21 = arith.constant 0 : index
      %c0_22 = arith.constant 0 : index
      %c0_23 = arith.constant 0 : index
      %36 = vector.load %arg5[%c0_20, %c0_21, %c0_22, %c0_23] : memref<1x1x1x1xf32, #tpu.memory_space<vmem>>, vector<1x1x1x1xf32>
      tpu.vector_store %arg5[%c0_20, %c0_21, %c0_22, %c0_23], %35 {strides = array<i32>} : memref<1x1x1x1xf32, #tpu.memory_space<vmem>>, vector<1x1x1x1xf32>,
    } else {
    }
    return
  }
  func.func @transform_0(%arg0: i32, %arg1: i32, %arg2: i32) -> (i32, i32, i32, i32) {
    %c1_i32 = arith.constant 1 : i32
    %0 = arith.muli %arg1, %c1_i32 : i32
    %1 = arith.addi %0, %arg2 : i32
    %c0_i32 = arith.constant 0 : i32
    %c0_i32_0 = arith.constant 0 : i32
    %c0_i32_1 = arith.constant 0 : i32
    return %arg0, %c0_i32, %1, %c0_i32_0 : i32, i32, i32, i32
  }
  func.func @transform_1(%arg0: i32, %arg1: i32, %arg2: i32) -> (i32, i32, i32, i32) {
    %c1_i32 = arith.constant 1 : i32
    %0 = arith.muli %arg1, %c1_i32 : i32
    %1 = arith.addi %0, %arg2 : i32
    %c0_i32 = arith.constant 0 : i32
    %c0_i32_0 = arith.constant 0 : i32
    %c0_i32_1 = arith.constant 0 : i32
    return %arg0, %c0_i32, %1, %c0_i32_0 : i32, i32, i32, i32
  }
  func.func @transform_2(%arg0: i32, %arg1: i32, %arg2: i32) -> (i32, i32, i32, i32) {
    %c0_i32 = arith.constant 0 : i32
    %c0_i32_0 = arith.constant 0 : i32
    %c0_i32_1 = arith.constant 0 : i32
    return %arg0, %arg1, %c0_i32, %c0_i32_0 : i32, i32, i32, i32
  }
}

</mosaic_0001>

<llo_original>
// kernel: tpu_custom_call.1
$region0: #{tpu_custom_call.1}
  #allocation0 [shape = 'u32[]', space=smem, size = 0x4, offset = 0x4, fixed_abs, tag = 'smem constant byte address 0x4 - core index']
  #allocation1 [shape = 'u32[72,128]{1,0:T(1,128)}', space=vmem, size = 0x9000, scoped, tag = 'internal scratch']
  #allocation2 [shape = 'f32[2,128]{1,0:T(2,128)}', space=vmem, size = 0x400, scoped, tag = 'scratch operand']
  %s0 = inlined_call_operand.hbm [shape: f32[2,4,2,128], index: 0, kind: input, shape index: {}]
  %s1 = inlined_call_operand.hbm [shape: s8[2,1,2,128], index: 1, kind: input, shape index: {}]
  %s2 = inlined_call_operand.vmem [shape: f32[2,1,1,1], index: 2, kind: output, shape index: {}]
  %s3 = sld [smem:[#allocation0]]
  $region57: #{tpu_custom_call.1} parent=0
    _
  %s5 = ssub.s32 1, %s3
  %s6 = scalar_select 0, %s5, %s3
  $region1: #{tpu_custom_call.1} parent=0
    #allocation3 [shape = 'u8[8192]{0}', space=vmem, size = 0x2000, scoped, tag = 'input window, operand 0']
    #allocation4 [shape = 's32[2]{0}', space=sflag, size = 0x8, scoped, tag = 'scoped memory for tpu_custom_call.1']
    #allocation5 [shape = 'u8[1024]{0}', space=vmem, size = 0x400, scoped, tag = 'input window, operand 1']
    #allocation6 [shape = 's32[2]{0}', space=sflag, size = 0x8, scoped, tag = 'scoped memory for tpu_custom_call.1']
    %7 = vsyncpa [#allocation4], 0
    %s8 = scalar_lea.sflag [#allocation4], 1
    %9 = vsyncpa %s8, 0
    %10 = vsyncpa [#allocation6], 0
    %s11 = scalar_lea.sflag [#allocation6], 1
    %12 = vsyncpa %s11, 0
    loop: start=0, step=1, limit=4
    $region2: #{tpu_custom_call.1} parent=1 // loop_pre_header
      _
    $region3: #{tpu_custom_call.1} parent=1 // loop_header
      %s14 = sphi 0, %s18
      %p15 = scmp.ge.s32.totalorder %s14, 4
      %s21 = sphi 0, %s40
      %s22 = sphi 0, %s36
      %s23 = sphi 0, %s32
      %s24 = sphi 0, %s21
      %s25 = sphi 0, %s22
      %s26 = sphi 0, %s23
      %s27 = sphi 0, %s24
      %s28 = sphi 0, %s25
      %s29 = sphi 0, %s26
      %s47 = sphi 0, %s49
      %s50 = sphi 0, %s47
      %s51 = sphi 0, %s50
      %s67 = sphi 0, %s51
      %s77 = sphi 0, %s79
      %s80 = sphi 0, %s77
      %s81 = sphi 0, %s80
      %s97 = sphi 0, %s81
      %s105 = sphi 0, %s107
      %s108 = sphi 0, %s105
      %s109 = sphi 0, %s108
      %s125 = sphi 0, %s109
    $region4: #{tpu_custom_call.1} parent=1 // loop_header_branch
      %17 = sbr.rel (%p15) target = $region8
    $region5: #{tpu_custom_call.1} parent=1 // loop_body
      %s19 = ssub.s32 %s14, 1
      %s20 = ssub.s32 %s14, 2
      %s30 = sadd.s32 1, %s23
      %p31 = scmp.ge.s32.totalorder %s30, 1
      %s32 = scalar_select %p31, 0, %s30
      %s33 = sadd.s32 1, %s22
      %s34 = scalar_select %p31, %s33, %s22
      %p35 = scmp.ge.s32.totalorder %s34, 1
      %s36 = scalar_select %p35, 0, %s34
      %s37 = sadd.s32 1, %s21
      %s38 = scalar_select %p35, %s37, %s21
      %p39 = scmp.ge.s32.totalorder %s38, 2
      %s40 = scalar_select %p39, 0, %s38
      %s41 = sadd.s32 %s22, %s23
      %s42 = sadd.s32 %s36, %s32
      %s43 = ssub.s32 %s21, %s40
      %s44 = ssub.s32 %s41, %s42
      %s45 = sor.u32 %s43, %s44
      %p46 = scmp.eq.s32.totalorder %s45, 0
      %s48 = sadd.s32 %s47, 1
      %s49 = scalar_select %p46, %s47, %s48
      %p52 = pneg %p46
      %p53 = scmp.eq.s32.totalorder %s14, 1
      %p54 = por %p52, %p53
      %p55 = scmp.ne.s32.totalorder %s47, %s50
      %p56 = scmp.eq.s32.totalorder %s14, 0
      %p57 = por %p55, %p56
      %p58 = scmp.ne.s32.totalorder %s47, %s50
      %p59 = scmp.eq.s32.totalorder %s19, 1
      %p60 = por %p58, %p59
      %p61 = scmp.ne.s32.totalorder %s50, %s51
      %p62 = scmp.eq.s32.totalorder %s19, 0
      %p63 = por %p61, %p62
      %p64 = scmp.ne.s32.totalorder %s50, %s51
      %p65 = scmp.eq.s32.totalorder %s20, 1
      %p66 = por %p64, %p65
      %p68 = scmp.ne.s32.totalorder %s51, %s67
      %p69 = scmp.eq.s32.totalorder %s20, 0
      %p70 = por %p68, %p69
      %s71 = sadd.s32 %s22, %s23
      %s72 = sadd.s32 %s36, %s32
      %s73 = ssub.s32 %s21, %s40
      %s74 = ssub.s32 %s71, %s72
      %s75 = sor.u32 %s73, %s74
      %p76 = scmp.eq.s32.totalorder %s75, 0
      %s78 = sadd.s32 %s77, 1
      %s79 = scalar_select %p76, %s77, %s78
      %p82 = pneg %p76
      %p83 = scmp.eq.s32.totalorder %s14, 1
      %p84 = por %p82, %p83
      %p85 = scmp.ne.s32.totalorder %s77, %s80
      %p86 = scmp.eq.s32.totalorder %s14, 0
      %p87 = por %p85, %p86
      %p88 = scmp.ne.s32.totalorder %s77, %s80
      %p89 = scmp.eq.s32.totalorder %s19, 1
      %p90 = por %p88, %p89
      %p91 = scmp.ne.s32.totalorder %s80, %s81
      %p92 = scmp.eq.s32.totalorder %s19, 0
      %p93 = por %p91, %p92
      %p94 = scmp.ne.s32.totalorder %s80, %s81
      %p95 = scmp.eq.s32.totalorder %s20, 1
      %p96 = por %p94, %p95
      %p98 = scmp.ne.s32.totalorder %s81, %s97
      %p99 = scmp.eq.s32.totalorder %s20, 0
      %p100 = por %p98, %p99
      %s101 = ssub.s32 %s21, %s40
      %s102 = ssub.s32 %s22, %s36
      %s103 = sor.u32 %s101, %s102
      %p104 = scmp.eq.s32.totalorder %s103, 0
      %s106 = sadd.s32 %s105, 1
      %s107 = scalar_select %p104, %s105, %s106
      %p110 = pneg %p104
      %p111 = scmp.eq.s32.totalorder %s14, 1
      %p112 = por %p110, %p111
      %p113 = scmp.ne.s32.totalorder %s105, %s108
      %p114 = scmp.eq.s32.totalorder %s14, 0
      %p115 = por %p113, %p114
      %p116 = scmp.ne.s32.totalorder %s105, %s108
      %p117 = scmp.eq.s32.totalorder %s19, 1
      %p118 = por %p116, %p117
      %p119 = scmp.ne.s32.totalorder %s108, %s109
      %p120 = scmp.eq.s32.totalorder %s19, 0
      %p121 = por %p119, %p120
      %p122 = scmp.ne.s32.totalorder %s108, %s109
      %p123 = scmp.eq.s32.totalorder %s20, 1
      %p124 = por %p122, %p123
      %p126 = scmp.ne.s32.totalorder %s109, %s125
      %p127 = scmp.eq.s32.totalorder %s20, 0
      %p128 = por %p126, %p127
      %p129 = scmp.le.s32.totalorder 1, %s14
      %p130 = scmp.lt.s32.totalorder %s14, 3
      %p131 = pnand %p129, %p130
      %p132 = pneg %p131
      // Predicated region
      $region9: #{tpu_custom_call.1} parent=5 // pred_check
        _
      $region10: #{tpu_custom_call.1} parent=5 // pred_check_branch
        %134 = sbr.rel (%p131) target = $region12
      $region11: #{tpu_custom_call.1} parent=5 // pred_region
        %s135 = ssub.s32 %s14, 1
      $region12: #{tpu_custom_call.1} parent=5 // pred_fallthru
        _
      %p136 = scmp.lt.s32.totalorder %s14, 2
      // Predicated region
      $region13: #{tpu_custom_call.1} parent=5 // pred_check
        %p137 = pneg %p136
      $region14: #{tpu_custom_call.1} parent=5 // pred_check_branch
        %139 = sbr.rel (%p137) target = $region16
      $region15: #{tpu_custom_call.1} parent=5 // pred_region
        // Predicated region
        $region17: #{tpu_custom_call.1} parent=15 // pred_check
          %p140 = pneg %p57
        $region18: #{tpu_custom_call.1} parent=15 // pred_check_branch
          %142 = sbr.rel (%p140) target = $region20
        $region19: #{tpu_custom_call.1} parent=15 // pred_region
          %s143 = sand.u32 %s47, 1
          %s144 = scalar_lea.sflag [#allocation4], %s143
          %s145 = sand.u32 %s47, 1
          %s146 = smul.addr %s145, 8
          %s147 = scalar_lea.vmem [#allocation3], %s146
          %s148 = sadd.s32 %s22, %s23
          %150 = vsyncadd %s144, 0
          %s151 = smul.addr %s21, 4
          %s152 = sadd.s32 %s148, %s151
          %s153 = smul.addr %s152, 2
          %s154 = scalar_lea.hbm %s0, %s153
          %s155 = sshll.u32 %s154, 4
          %s156 = int_to_ptr.hbm [resolvable:$true] %s155
          %s157 = sshll.u32 %s147, 4
          %s158 = int_to_ptr.vmem [resolvable:$true] %s157
          %163 = dma.hbm_to_vmem [thread:$0]  %s156, 128, %s158, %s144, 32, 32, 2
        $region20: #{tpu_custom_call.1} parent=15 // pred_fallthru
          _
        // Predicated region
        $region21: #{tpu_custom_call.1} parent=15 // pred_check
          %p164 = pneg %p87
        $region22: #{tpu_custom_call.1} parent=15 // pred_check_branch
          %166 = sbr.rel (%p164) target = $region24
        $region23: #{tpu_custom_call.1} parent=15 // pred_region
          %s167 = sand.u32 %s77, 1
          %s168 = scalar_lea.sflag [#allocation6], %s167
          %s169 = sand.u32 %s77, 1
          %s170 = scalar_lea.vmem [#allocation5], %s169
          %s171 = sadd.s32 %s22, %s23
          %173 = vsyncadd %s168, 0
          %s174 = sadd.s32 %s171, %s21
          %s175 = scalar_lea.hbm %s1, %s174
          %s177 = sshll.u32 %s175, 4
          %s178 = int_to_ptr.hbm [resolvable:$true] %s177
          %s179 = sshll.u32 %s170, 4
          %s180 = int_to_ptr.vmem [resolvable:$true] %s179
          %182 = dma.hbm_to_vmem [thread:$0]  %s178, 16, %s180, %s168
        $region24: #{tpu_custom_call.1} parent=15 // pred_fallthru
          _
      $region16: #{tpu_custom_call.1} parent=5 // pred_fallthru
        _
      %p183 = scmp.le.s32.totalorder 1, %s14
      %p184 = scmp.lt.s32.totalorder %s14, 3
      %p185 = pnand %p183, %p184
      %p186 = pneg %p185
      // Predicated region
      $region25: #{tpu_custom_call.1} parent=5 // pred_check
        _
      $region26: #{tpu_custom_call.1} parent=5 // pred_check_branch
        %188 = sbr.rel (%p185) target = $region28
      $region27: #{tpu_custom_call.1} parent=5 // pred_region
        %s189 = ssub.s32 %s14, 1
        %s190 = sand.u32 %s50, 1
        %s191 = scalar_lea.sflag [#allocation4], %s190
        %s192 = sand.u32 %s50, 1
        %s193 = smul.addr %s192, 8
        %s194 = scalar_lea.vmem [#allocation3], %s193
        // Predicated region
        $region29: #{tpu_custom_call.1} parent=27 // pred_check
          %p195 = pneg %p63
        $region30: #{tpu_custom_call.1} parent=27 // pred_check_branch
          %197 = sbr.rel (%p195) target = $region32
        $region31: #{tpu_custom_call.1} parent=27 // pred_region
          %199 = dma.done %s191, 128
        $region32: #{tpu_custom_call.1} parent=27 // pred_fallthru
          _
        %s200 = sand.u32 %s80, 1
        %s201 = scalar_lea.sflag [#allocation6], %s200
        %s202 = sand.u32 %s80, 1
        %s203 = scalar_lea.vmem [#allocation5], %s202
        // Predicated region
        $region33: #{tpu_custom_call.1} parent=27 // pred_check
          %p204 = pneg %p93
        $region34: #{tpu_custom_call.1} parent=27 // pred_check_branch
          %206 = sbr.rel (%p204) target = $region36
        $region35: #{tpu_custom_call.1} parent=27 // pred_region
          %208 = dma.done %s201, 16
        $region36: #{tpu_custom_call.1} parent=27 // pred_fallthru
          _
        %s209 = sand.u32 %s50, 1
        %s210 = scalar_lea.sflag [#allocation4], %s209
        %s211 = sand.u32 %s50, 1
        %s212 = smul.addr %s211, 8
        %s213 = scalar_lea.vmem [#allocation3], %s212
        %p214 = pneg %p63
        %p215 = pneg %p60
        %s216 = sand.u32 %s80, 1
        %s217 = scalar_lea.sflag [#allocation6], %s216
        %s218 = sand.u32 %s80, 1
        %s219 = scalar_lea.vmem [#allocation5], %s218
        %p220 = pneg %p93
        %p221 = pneg %p90
        %p222 = pneg %p121
        %p223 = pneg %p118
        %p224 = scmp.lt.s32.totalorder %s24, 1
        %s225 = scalar_select %p224, %s24, 1
        %p226 = scmp.lt.s32.totalorder %s25, 0
        %s227 = scalar_select %p226, %s25, 0
        %s228 = sadd.s32 %s227, %s225
        %s229 = scalar_lea.vmem %s2, %s228
        %s230 = sadd.s32 %s25, %s26
        %s231 = sadd.s32 %s25, %s26
        %p232 = scmp.lt.s32.totalorder %s24, 1
        %s233 = scalar_select %p232, %s24, 1
        %p234 = scmp.lt.s32.totalorder %s25, 0
        %s235 = scalar_select %p234, %s25, 0
        %s236 = sadd.s32 %s235, %s233
        %s237 = scalar_lea.vmem %s2, %s236
        %p238 = scmp.eq.s32.totalorder %s26, 0
        // Predicated region
        $region37: #{tpu_custom_call.1} parent=27 // pred_check
          %p239 = pneg %p238
        $region38: #{tpu_custom_call.1} parent=27 // pred_check_branch
          %241 = sbr.rel (%p239) target = $region40
        $region39: #{tpu_custom_call.1} parent=27 // pred_region
          %242 = vst [vmem:[#allocation2] sm:$0x3] 0.0
        $region40: #{tpu_custom_call.1} parent=27 // pred_fallthru
          _
        %v243 = vld [vmem:[%s194] sm:$0x3]
        %v244 = vld [vmem:[%s194 + $0x2] sm:$0x3]
        %v245 = vld [vmem:[%s194 + $0x4] sm:$0x3]
        %v246 = vld [vmem:[%s194 + $0x6] sm:$0x3]
        %v247 = vld [vmem:[%s203] sm:$0x1]
        %v248 = vunpack.c.0.s8 %v247
        %vm249 = vcmask 1041408
        %v250 = vsel %vm249, %v243, -inf
        %v251 = vsel %vm249, %v244, -inf
        %v252 = vsel %vm249, %v245, -inf
        %v253 = vsel %vm249, %v246, -inf
        %v254 = vmax.f32 %v250, %v251
        %v255 = vmax.f32 %v252, %v253
        %v256 = vmax.f32 %v254, %v255
        %v257 = vsub.f32 %v243, %v256
        %v258 = vsub.f32 %v244, %v256
        %v259 = vsub.f32 %v245, %v256
        %v260 = vsub.f32 %v246, %v256
        %v261 = vmul.f32 %v257, 1.442695
        %v262 = vpow.pop %v261
        %v263 = vmul.f32 %v258, 1.442695
        %v264 = vpow.pop %v263
        %v265 = vmul.f32 %v259, 1.442695
        %v266 = vpow.pop %v265
        %v267 = vmul.f32 %v260, 1.442695
        %v268 = vpow.pop %v267
        %v269 = vsel %vm249, %v262, 0.0
        %v270 = vsel %vm249, %v264, 0.0
        %v271 = vadd.f32 %v269, %v270
        %v272 = vsel %vm249, %v266, 0.0
        %v273 = vadd.f32 %v271, %v272
        %v274 = vsel %vm249, %v268, 0.0
        %v275 = vadd.f32 %v273, %v274
        %v276 = vlog2.pop %v275
        %v277 = vmul.f32 %v276, 0.6931472
        %v278 = vadd.f32 %v256, %v277
        %vm279 = vcmp.eq.s32.totalorder %v248, 0
        %vm280 = vcmp.eq.s32.totalorder %v248, 1
        %vm281 = vcmp.eq.s32.totalorder %v248, 2
        %vm282 = vcmp.eq.s32.totalorder %v248, 3
        %v283 = vsel %vm279, %v243, 0.0
        %v284 = vsel %vm280, %v244, 0.0
        %v285 = vsel %vm281, %v245, 0.0
        %v286 = vsel %vm282, %v246, 0.0
        %v287 = vsel %vm249, %v283, 0.0
        %v288 = vsel %vm249, %v284, 0.0
        %v289 = vadd.f32 %v287, %v288
        %v290 = vsel %vm249, %v285, 0.0
        %v291 = vadd.f32 %v289, %v290
        %v292 = vsel %vm249, %v286, 0.0
        %v293 = vadd.f32 %v291, %v292
        %v294 = vsub.f32 %v278, %v293
        %v295 = vld [vmem:[#allocation2] sm:$0x3]
        %v296 = vadd.f32 %v295, %v294
        %297 = vst [vmem:[#allocation2] sm:$0x3] %v296
        // Predicated region
        $region41: #{tpu_custom_call.1} parent=27 // pred_check
          %p298 = pneg %p238
        $region42: #{tpu_custom_call.1} parent=27 // pred_check_branch
          %300 = sbr.rel (%p298) target = $region44
        $region43: #{tpu_custom_call.1} parent=27 // pred_region
          %v301 = vld [vmem:[#allocation2] sm:$0x3]
          %v302 = vsel %vm249, %v301, 0.0
          %303 = vadd.xlane.f32.xlu0 %v302
          %v304 = vpop.xlane.xlu0 %303
          %v305 = vrot.slane %v304, 4
          %v306 = vadd.f32 %v304, %v305
          %v307 = vrot.slane %v306, 2
          %v308 = vadd.f32 %v306, %v307
          %v309 = vrot.slane %v308, 1
          %v310 = vadd.f32 %v308, %v309
          %s311 = vtos %v310
          %v312 = vstv %s311
          %vm313 = vcmask 0
          %314 = vst.msk [vmem:[%s237] sm:$0x1] %vm313, %v312
        $region44: #{tpu_custom_call.1} parent=27 // pred_fallthru
          _
        %p315 = scmp.lt.s32.totalorder %s24, 1
        %s316 = scalar_select %p315, %s24, 1
        %p317 = scmp.lt.s32.totalorder %s25, 0
        %s318 = scalar_select %p317, %s25, 0
        %s319 = sadd.s32 %s318, %s316
        %s320 = scalar_lea.vmem %s2, %s319
        // Predicated region
        $region45: #{tpu_custom_call.1} parent=27 // pred_check
          %p321 = pneg %p118
        $region46: #{tpu_custom_call.1} parent=27 // pred_check_branch
          %323 = sbr.rel (%p321) target = $region48
        $region47: #{tpu_custom_call.1} parent=27 // pred_region
          _
        $region48: #{tpu_custom_call.1} parent=27 // pred_fallthru
          _
      $region28: #{tpu_custom_call.1} parent=5 // pred_fallthru
        _
      %p324 = scmp.le.s32.totalorder 2, %s14
      // Predicated region
      $region49: #{tpu_custom_call.1} parent=5 // pred_check
        %p325 = pneg %p324
      $region50: #{tpu_custom_call.1} parent=5 // pred_check_branch
        %327 = sbr.rel (%p325) target = $region52
      $region51: #{tpu_custom_call.1} parent=5 // pred_region
        %s328 = ssub.s32 %s14, 2
        // Predicated region
        $region53: #{tpu_custom_call.1} parent=51 // pred_check
          %p329 = pneg %p124
        $region54: #{tpu_custom_call.1} parent=51 // pred_check_branch
          %331 = sbr.rel (%p329) target = $region56
        $region55: #{tpu_custom_call.1} parent=51 // pred_region
          %p332 = scmp.lt.s32.totalorder %s27, 1
          %s333 = scalar_select %p332, %s27, 1
          %p334 = scmp.lt.s32.totalorder %s28, 0
          %s335 = scalar_select %p334, %s28, 0
          %s336 = sadd.s32 %s335, %s333
          %s337 = scalar_lea.vmem %s2, %s336
        $region56: #{tpu_custom_call.1} parent=51 // pred_fallthru
          _
      $region52: #{tpu_custom_call.1} parent=5 // pred_fallthru
        _
    $region6: #{tpu_custom_call.1} parent=1 // loop_footer
      %s18 = sadd.s32 1, %s14
    $region7: #{tpu_custom_call.1} parent=1 // loop_footer_branch
      %13 = sbr.rel target = $region3
    $region8: #{tpu_custom_call.1} parent=1 // loop_exit
      _
    %338 = vsyncpa [#allocation4], 1
    %s339 = scalar_lea.sflag [#allocation4], 1
    %340 = vsyncpa %s339, 1
    %341 = vsyncpa [#allocation6], 1
    %s342 = scalar_lea.sflag [#allocation6], 1
    %343 = vsyncpa %s342, 1

</llo_original>
